<compile_context>
chip_gen: v5e
topology: v5e:2x2
jax: 0.10.0
libtpu: 0.0.40
codegen_flags: <defaults>
</compile_context>

<pallas_src>
import functools

import jax
import jax.numpy as jnp
from jax import lax
from jax.experimental import pallas as pl
from jax.experimental.pallas import tpu as pltpu


# --------------------------------------------------------------------------- #
# Kernel
# --------------------------------------------------------------------------- #
def _agt_both_kernel(x_ref, w_ref, o_ref, *, hc):
    # x_ref / o_ref : (1, tc, H, W)   I/O dtype
    # w_ref         : (2, tc, 1, 1)   f32; row 0 = w_h/W, row 1 = w_w/H
    # hc            : static H-chunk size (rows processed per step)
    _, tc, H, W = x_ref.shape
    n_full, rem = divmod(H, hc)
    static_loop = n_full <= 16          # unrolled straight-line for short loops

    def chunk_f32(r0, size):
        return x_ref[:, :, pl.ds(r0, size), :].astype(jnp.float32)

    # ---- pass 1: sum over H (f32), chunked so no full-block f32 temp -------
    sum_h = jnp.zeros((1, tc, 1, W), jnp.float32)
    if static_loop:
        for i in range(n_full):
            sum_h = sum_h + jnp.sum(chunk_f32(i * hc, hc), axis=2, keepdims=True)
    else:
        def p1_body(i, acc):
            r0 = pl.multiple_of(i * hc, hc)
            return acc + jnp.sum(chunk_f32(r0, hc), axis=2, keepdims=True)
        sum_h = lax.fori_loop(0, n_full, p1_body, sum_h)
    if rem:
        sum_h = sum_h + jnp.sum(chunk_f32(n_full * hc, rem), axis=2, keepdims=True)

    wh = w_ref[0:1].astype(jnp.float32)       # (1, tc, 1, 1), pre-scaled by 1/W
    ww = w_ref[1:2].astype(jnp.float32)       # (1, tc, 1, 1), pre-scaled by 1/H
    width_term = ww * sum_h                   # (1, tc, 1, W); hoisted out of loop

    # ---- pass 2: per-chunk combine + store in I/O dtype ---------------------
    def combine(r0, size):
        xc = chunk_f32(r0, size)                          # (1, tc, size, W) f32
        row_sum = jnp.sum(xc, axis=3, keepdims=True)      # (1, tc, size, 1) f32
        yc = xc + wh * row_sum + width_term
        o_ref[:, :, pl.ds(r0, size), :] = yc.astype(o_ref.dtype)

    if static_loop:
        for i in range(n_full):
            combine(i * hc, hc)
    else:
        def p2_body(i, carry):
            combine(pl.multiple_of(i * hc, hc), hc)
            return carry
        lax.fori_loop(0, n_full, p2_body, 0)
    if rem:
        combine(n_full * hc, rem)


# --------------------------------------------------------------------------- #
# Tiling heuristics
# --------------------------------------------------------------------------- #
def _choose_channel_tile(B, C, H, W, itemsize, block_budget_bytes):
    """Largest divisor of C whose (1,tc,H,W) block fits the budget; prefer >=8 steps."""
    per_ch = H * W * itemsize
    divisors = [d for d in range(1, C + 1) if C % d == 0]
    tc = 1
    for d in divisors:
        if d * per_ch <= block_budget_bytes:
            tc = d
    # Prefer >= 8 total grid steps (megacore + pipelining) while blocks >= 256 KiB.
    while B * (C // tc) < 8 and tc > 1:
        smaller = max(d for d in divisors if d < tc)
        if smaller * per_ch < (256 << 10):
            break
        tc = smaller
    return tc


def _choose_h_chunk(H, tc, W, itemsize, chunk_budget_bytes):
    """Rows per in-kernel chunk so one f32 chunk temp is ~<= chunk_budget_bytes."""
    rows = chunk_budget_bytes // max(1, tc * W * 4)
    if rows >= H:
        return H
    align = max(8, 32 // max(1, itemsize))      # f32: 8, bf16: 16, int8: 32
    if rows >= align:
        rows = (rows // align) * align
    elif rows >= 8:
        rows = (rows // 8) * 8
    return max(1, rows)


def _ceil_to(x, m):
    return -(-x // m) * m


# --------------------------------------------------------------------------- #
# Wrapper
# --------------------------------------------------------------------------- #
def local_global_aggregate(x, w_h, w_w, *,
                           block_budget_bytes=3 << 20,
                           chunk_budget_bytes=1 << 20):
    """agt-only LocalGlobalAggregate forward (NCHW, same layout as the module).

    x:        (B, C, H, W), any float dtype (output has the same dtype/layout).
    w_h, w_w: (C,) depthwise Conv1d(k=1) weights of the height-/width-aggregate.
    """
    B, C, H, W = x.shape
    out_dtype = x.dtype
    in_itemsize = jnp.dtype(x.dtype).itemsize

    # Fold the 1/W and 1/H of the means into the weights; pack into one input.
    w_packed = jnp.stack(
        [w_h.astype(jnp.float32) / W, w_w.astype(jnp.float32) / H],
        axis=0).reshape(2, C, 1, 1)

    tc = _choose_channel_tile(B, C, H, W, in_itemsize, block_budget_bytes)
    hc = _choose_h_chunk(H, tc, W, in_itemsize, chunk_budget_bytes)

    # ---- VMEM accounting (padded blocks + weight padding + kernel temps) ----
    h_pad, w_pad, hc_pad = _ceil_to(H, 8), _ceil_to(W, 128), _ceil_to(hc, 8)
    block_in = tc * h_pad * w_pad * in_itemsize
    block_out = tc * h_pad * w_pad * jnp.dtype(out_dtype).itemsize
    w_block = 2 * tc * 8 * 128 * 4                 # (1,1) slabs pad to (8,128)
    kern_tmp = 3 * tc * hc_pad * w_pad * 4 + 4 * tc * 8 * w_pad * 4
    vmem_need = 2 * (block_in + block_out) + 2 * w_block + kern_tmp + (2 << 20)
    vmem_limit = int(min(max(vmem_need, 32 << 20), 100 << 20))

    grid = (B, C // tc)
    kernel = functools.partial(_agt_both_kernel, hc=hc)

    return pl.pallas_call(
        kernel,
        out_shape=jax.ShapeDtypeStruct((B, C, H, W), out_dtype),
        grid=grid,
        in_specs=[
            pl.BlockSpec((1, tc, H, W), lambda b, c: (b, c, 0, 0)),
            pl.BlockSpec((2, tc, 1, 1), lambda b, c: (0, c, 0, 0)),
        ],
        out_specs=pl.BlockSpec((1, tc, H, W), lambda b, c: (b, c, 0, 0)),
        compiler_params=pltpu.CompilerParams(
            dimension_semantics=("parallel", "parallel"),
            vmem_limit_bytes=vmem_limit),
    )(x, w_packed)


# --------------------------------------------------------------------------- #
# Pure-JAX reference and self-test
# --------------------------------------------------------------------------- #
def _reference_nchw(x, w_h, w_w):
    xf = x.astype(jnp.float32)
    mean_over_w = jnp.mean(xf, axis=-1, keepdims=True)   # (B, C, H, 1)
    mean_over_h = jnp.mean(xf, axis=-2, keepdims=True)   # (B, C, 1, W)
    wh = w_h.astype(jnp.float32).reshape(1, -1, 1, 1)
    ww = w_w.astype(jnp.float32).reshape(1, -1, 1, 1)
    return (xf + wh * mean_over_w + ww * mean_over_h).astype(x.dtype)


if __name__ == "__main__":
    key = jax.random.PRNGKey(0)
    kx1, kh1, kw1, kx3, kh3, kw3, kx4, kh4, kw4 = jax.random.split(key, 9)

    # 1) module-sized f32 check (NCHW, same interface as the PyTorch module).
    B, C, H, W = 2, 4, 16, 16
    x = jax.random.normal(kx1, (B, C, H, W), dtype=jnp.float32)
    w_h = jax.random.normal(kh1, (C,), dtype=jnp.float32) * 0.1
    w_w = jax.random.normal(kw1, (C,), dtype=jnp.float32) * 0.1
    out = jax.block_until_ready(local_global_aggregate(x, w_h, w_w))
    ref = _reference_nchw(x, w_h, w_w)
    assert out.shape == x.shape and out.dtype == x.dtype
    assert jnp.allclose(out, ref, atol=1e-4, rtol=1e-4), "f32 mismatch vs reference"

    # 2) bf16 I/O (f32 accumulation inside the kernel).
    xb = x.astype(jnp.bfloat16)
    out_b = jax.block_until_ready(local_global_aggregate(xb, w_h, w_w))
    ref_b = _reference_nchw(xb, w_h, w_w)
    assert out_b.dtype == jnp.bfloat16
    assert jnp.allclose(out_b.astype(jnp.float32), ref_b.astype(jnp.float32),
                        atol=2e-2, rtol=2e-2), "bf16 mismatch vs reference"

    # 3) exercise the in-kernel H-chunking + remainder path (bf16, H=44).
    C3, H3, W3 = 6, 44, 128
    x3 = jax.random.normal(kx3, (1, C3, H3, W3), dtype=jnp.float32).astype(jnp.bfloat16)
    w_h3 = jax.random.normal(kh3, (C3,), dtype=jnp.float32) * 0.1
    w_w3 = jax.random.normal(kw3, (C3,), dtype=jnp.float32) * 0.1
    out3 = jax.block_until_ready(
        local_global_aggregate(x3, w_h3, w_w3, chunk_budget_bytes=32 << 10))
    ref3 = _reference_nchw(x3, w_h3, w_w3)
    assert jnp.allclose(out3.astype(jnp.float32), ref3.astype(jnp.float32),
                        atol=2e-2, rtol=2e-2), "chunked bf16 mismatch vs reference"

    # 4) exercise the many-chunk (fori_loop) path and the C grid axis (f32).
    C4, H4, W4 = 4, 256, 128
    x4 = jax.random.normal(kx4, (1, C4, H4, W4), dtype=jnp.float32)
    w_h4 = jax.random.normal(kh4, (C4,), dtype=jnp.float32) * 0.1
    w_w4 = jax.random.normal(kw4, (C4,), dtype=jnp.float32) * 0.1
    out4 = jax.block_until_ready(
        local_global_aggregate(x4, w_h4, w_w4, chunk_budget_bytes=8 << 10))
    ref4 = _reference_nchw(x4, w_h4, w_w4)
    assert jnp.allclose(out4, ref4, atol=1e-4, rtol=1e-4), \
        "many-chunk f32 mismatch vs reference"

    print("KERNEL_OK")
</pallas_src>

<mosaic_0001>
module attributes {stable_mosaic.version = 11 : i64} {
  func.func @_agt_both_kernel(%arg0: i32, %arg1: i32, %arg2: memref<1x4x16x16xf32, #tpu.memory_space<vmem>>, %arg3: memref<2x4x1x1xf32, #tpu.memory_space<vmem>>, %arg4: memref<1x4x16x16xf32, #tpu.memory_space<vmem>>) attributes {dimension_semantics = [#tpu.dimension_semantics<parallel>, #tpu.dimension_semantics<parallel>], iteration_bounds = array<i64: 2, 1>, scalar_prefetch = 0 : i64, scratch_operands = 0 : i64, tpu.core_type = #tpu.core_type<tc>, window_params = [{transform_indices = @transform_0, window_bounds = array<i64: 1, 4, 16, 16>}, {transform_indices = @transform_1, window_bounds = array<i64: 2, 4, 1, 1>}, {transform_indices = @transform_2, window_bounds = array<i64: 1, 4, 16, 16>}]} {
    %cst = arith.constant 0.000000e+00 : f32
    %0 = vector.broadcast %cst : f32 to vector<1x4x1x16xf32>
    %c0 = arith.constant 0 : index
    %c0_0 = arith.constant 0 : index
    %c0_1 = arith.constant 0 : index
    %c0_2 = arith.constant 0 : index
    %1 = vector.load %arg2[%c0, %c0_0, %c0_1, %c0_2] : memref<1x4x16x16xf32, #tpu.memory_space<vmem>>, vector<1x4x16x16xf32>
    %cst_3 = arith.constant dense<0.000000e+00> : vector<1x4x16xf32>
    %2 = vector.multi_reduction <add>, %1, %cst_3 [2] : vector<1x4x16x16xf32> to vector<1x4x16xf32>
    %3 = vector.shape_cast %2 : vector<1x4x16xf32> to vector<1x4x1x16xf32>
    %4 = arith.addf %0, %3 : vector<1x4x1x16xf32>
    %c0_4 = arith.constant 0 : index
    %c0_5 = arith.constant 0 : index
    %c0_6 = arith.constant 0 : index
    %c0_7 = arith.constant 0 : index
    %5 = vector.load %arg3[%c0_4, %c0_5, %c0_6, %c0_7] : memref<2x4x1x1xf32, #tpu.memory_space<vmem>>, vector<1x4x1x1xf32>
    %c1 = arith.constant 1 : index
    %c0_8 = arith.constant 0 : index
    %c0_9 = arith.constant 0 : index
    %c0_10 = arith.constant 0 : index
    %6 = vector.load %arg3[%c1, %c0_8, %c0_9, %c0_10] : memref<2x4x1x1xf32, #tpu.memory_space<vmem>>, vector<1x4x1x1xf32>
    %7 = vector.broadcast %6 : vector<1x4x1x1xf32> to vector<1x4x1x16xf32>
    %8 = arith.mulf %7, %4 : vector<1x4x1x16xf32>
    %c0_11 = arith.constant 0 : index
    %c0_12 = arith.constant 0 : index
    %c0_13 = arith.constant 0 : index
    %c0_14 = arith.constant 0 : index
    %9 = vector.load %arg2[%c0_11, %c0_12, %c0_13, %c0_14] : memref<1x4x16x16xf32, #tpu.memory_space<vmem>>, vector<1x4x16x16xf32>
    %cst_15 = arith.constant dense<0.000000e+00> : vector<1x4x16xf32>
    %10 = vector.multi_reduction <add>, %9, %cst_15 [3] : vector<1x4x16x16xf32> to vector<1x4x16xf32>
    %11 = vector.shape_cast %10 : vector<1x4x16xf32> to vector<1x4x16x1xf32>
    %12 = vector.broadcast %5 : vector<1x4x1x1xf32> to vector<1x4x16x1xf32>
    %13 = arith.mulf %12, %11 : vector<1x4x16x1xf32>
    %14 = vector.broadcast %13 : vector<1x4x16x1xf32> to vector<1x4x16x16xf32>
    %15 = arith.addf %9, %14 : vector<1x4x16x16xf32>
    %16 = vector.broadcast %8 : vector<1x4x1x16xf32> to vector<1x4x16x16xf32>
    %17 = arith.addf %15, %16 : vector<1x4x16x16xf32>
    %c0_16 = arith.constant 0 : index
    %c0_17 = arith.constant 0 : index
    %c0_18 = arith.constant 0 : index
    %c0_19 = arith.constant 0 : index
    %18 = vector.load %arg4[%c0_16, %c0_17, %c0_18, %c0_19] : memref<1x4x16x16xf32, #tpu.memory_space<vmem>>, vector<1x4x16x16xf32>
    tpu.vector_store %arg4[%c0_16, %c0_17, %c0_18, %c0_19], %17 {strides = array<i32>} : memref<1x4x16x16xf32, #tpu.memory_space<vmem>>, vector<1x4x16x16xf32>,
    return
  }
  func.func @transform_0(%arg0: i32, %arg1: i32) -> (i32, i32, i32, i32) {
    %c0_i32 = arith.constant 0 : i32
    %c0_i32_0 = arith.constant 0 : i32
    %c0_i32_1 = arith.constant 0 : i32
    return %arg0, %arg1, %c0_i32, %c0_i32_0 : i32, i32, i32, i32
  }
  func.func @transform_1(%arg0: i32, %arg1: i32) -> (i32, i32, i32, i32) {
    %c0_i32 = arith.constant 0 : i32
    %c0_i32_0 = arith.constant 0 : i32
    %c0_i32_1 = arith.constant 0 : i32
    %c0_i32_2 = arith.constant 0 : i32
    return %c0_i32, %arg1, %c0_i32_0, %c0_i32_1 : i32, i32, i32, i32
  }
  func.func @transform_2(%arg0: i32, %arg1: i32) -> (i32, i32, i32, i32) {
    %c0_i32 = arith.constant 0 : i32
    %c0_i32_0 = arith.constant 0 : i32
    %c0_i32_1 = arith.constant 0 : i32
    return %arg0, %arg1, %c0_i32, %c0_i32_0 : i32, i32, i32, i32
  }
}

</mosaic_0001>

<llo_original>
// kernel: tpu_custom_call.1
$region0: #{tpu_custom_call.1}
  #allocation0 [shape = 'u32[]', space=smem, size = 0x4, offset = 0x4, fixed_abs, tag = 'smem constant byte address 0x4 - core index']
  #allocation1 [shape = 'u32[72,128]{1,0:T(1,128)}', space=vmem, size = 0x9000, scoped, tag = 'internal scratch']
  %s0 = inlined_call_operand.hbm [shape: f32[2,4,16,16], index: 0, kind: input, shape index: {}]
  %s1 = inlined_call_operand.vmem [shape: f32[2,4,1,1], index: 1, kind: input, shape index: {}]
  %s2 = inlined_call_operand.hbm [shape: f32[2,4,16,16], index: 2, kind: output, shape index: {}]
  %s3 = sld [smem:[#allocation0]]
  $region45: #{tpu_custom_call.1} parent=0
    _
  %s5 = ssub.s32 1, %s3
  %s6 = scalar_select 0, %s5, %s3
  $region1: #{tpu_custom_call.1} parent=0
    #allocation2 [shape = 'u8[65536]{0}', space=vmem, size = 0x10000, scoped, tag = 'input window, operand 0']
    #allocation3 [shape = 's32[2]{0}', space=sflag, size = 0x8, scoped, tag = 'scoped memory for tpu_custom_call.1']
    #allocation4 [shape = 's32[2]{0}', space=sflag, size = 0x8, scoped, tag = 'scoped memory for tpu_custom_call.1']
    #allocation5 [shape = 'u8[65536]{0}', space=vmem, size = 0x10000, scoped, tag = 'output window, operand 0']
    %7 = vsyncpa [#allocation3], 0
    %s8 = scalar_lea.sflag [#allocation3], 1
    %9 = vsyncpa %s8, 0
    %10 = vsyncpa [#allocation4], 0
    %s11 = scalar_lea.sflag [#allocation4], 1
    %12 = vsyncpa %s11, 0
    loop: start=0, step=1, limit=4
    $region2: #{tpu_custom_call.1} parent=1 // loop_pre_header
      _
    $region3: #{tpu_custom_call.1} parent=1 // loop_header
      %s14 = sphi 0, %s18
      %p15 = scmp.ge.s32.totalorder %s14, 4
      %s21 = sphi 0, %s33
      %s22 = sphi 0, %s29
      %s23 = sphi 0, %s21
      %s24 = sphi 0, %s22
      %s25 = sphi 0, %s23
      %s26 = sphi 0, %s24
      %s38 = sphi 0, %s40
      %s41 = sphi 0, %s38
      %s42 = sphi 0, %s41
      %s58 = sphi 0, %s42
      %s64 = sphi 0, %s66
      %s67 = sphi 0, %s64
      %s68 = sphi 0, %s67
      %s84 = sphi 0, %s68
      %s92 = sphi 0, %s94
      %s95 = sphi 0, %s92
      %s96 = sphi 0, %s95
      %s112 = sphi 0, %s96
    $region4: #{tpu_custom_call.1} parent=1 // loop_header_branch
      %17 = sbr.rel (%p15) target = $region8
    $region5: #{tpu_custom_call.1} parent=1 // loop_body
      %s19 = ssub.s32 %s14, 1
      %s20 = ssub.s32 %s14, 2
      %s27 = sadd.s32 1, %s22
      %p28 = scmp.ge.s32.totalorder %s27, 1
      %s29 = scalar_select %p28, 0, %s27
      %s30 = sadd.s32 1, %s21
      %s31 = scalar_select %p28, %s30, %s21
      %p32 = scmp.ge.s32.totalorder %s31, 2
      %s33 = scalar_select %p32, 0, %s31
      %s34 = ssub.s32 %s21, %s33
      %s35 = ssub.s32 %s22, %s29
      %s36 = sor.u32 %s34, %s35
      %p37 = scmp.eq.s32.totalorder %s36, 0
      %s39 = sadd.s32 %s38, 1
      %s40 = scalar_select %p37, %s38, %s39
      %p43 = pneg %p37
      %p44 = scmp.eq.s32.totalorder %s14, 1
      %p45 = por %p43, %p44
      %p46 = scmp.ne.s32.totalorder %s38, %s41
      %p47 = scmp.eq.s32.totalorder %s14, 0
      %p48 = por %p46, %p47
      %p49 = scmp.ne.s32.totalorder %s38, %s41
      %p50 = scmp.eq.s32.totalorder %s19, 1
      %p51 = por %p49, %p50
      %p52 = scmp.ne.s32.totalorder %s41, %s42
      %p53 = scmp.eq.s32.totalorder %s19, 0
      %p54 = por %p52, %p53
      %p55 = scmp.ne.s32.totalorder %s41, %s42
      %p56 = scmp.eq.s32.totalorder %s20, 1
      %p57 = por %p55, %p56
      %p59 = scmp.ne.s32.totalorder %s42, %s58
      %p60 = scmp.eq.s32.totalorder %s20, 0
      %p61 = por %p59, %p60
      %s62 = ssub.s32 %s22, %s29
      %p63 = scmp.eq.s32.totalorder %s62, 0
      %s65 = sadd.s32 %s64, 1
      %s66 = scalar_select %p63, %s64, %s65
      %p69 = pneg %p63
      %p70 = scmp.eq.s32.totalorder %s14, 1
      %p71 = por %p69, %p70
      %p72 = scmp.ne.s32.totalorder %s64, %s67
      %p73 = scmp.eq.s32.totalorder %s14, 0
      %p74 = por %p72, %p73
      %p75 = scmp.ne.s32.totalorder %s64, %s67
      %p76 = scmp.eq.s32.totalorder %s19, 1
      %p77 = por %p75, %p76
      %p78 = scmp.ne.s32.totalorder %s67, %s68
      %p79 = scmp.eq.s32.totalorder %s19, 0
      %p80 = por %p78, %p79
      %p81 = scmp.ne.s32.totalorder %s67, %s68
      %p82 = scmp.eq.s32.totalorder %s20, 1
      %p83 = por %p81, %p82
      %p85 = scmp.ne.s32.totalorder %s68, %s84
      %p86 = scmp.eq.s32.totalorder %s20, 0
      %p87 = por %p85, %p86
      %s88 = ssub.s32 %s21, %s33
      %s89 = ssub.s32 %s22, %s29
      %s90 = sor.u32 %s88, %s89
      %p91 = scmp.eq.s32.totalorder %s90, 0
      %s93 = sadd.s32 %s92, 1
      %s94 = scalar_select %p91, %s92, %s93
      %p97 = pneg %p91
      %p98 = scmp.eq.s32.totalorder %s14, 1
      %p99 = por %p97, %p98
      %p100 = scmp.ne.s32.totalorder %s92, %s95
      %p101 = scmp.eq.s32.totalorder %s14, 0
      %p102 = por %p100, %p101
      %p103 = scmp.ne.s32.totalorder %s92, %s95
      %p104 = scmp.eq.s32.totalorder %s19, 1
      %p105 = por %p103, %p104
      %p106 = scmp.ne.s32.totalorder %s95, %s96
      %p107 = scmp.eq.s32.totalorder %s19, 0
      %p108 = por %p106, %p107
      %p109 = scmp.ne.s32.totalorder %s95, %s96
      %p110 = scmp.eq.s32.totalorder %s20, 1
      %p111 = por %p109, %p110
      %p113 = scmp.ne.s32.totalorder %s96, %s112
      %p114 = scmp.eq.s32.totalorder %s20, 0
      %p115 = por %p113, %p114
      %p116 = scmp.le.s32.totalorder 1, %s14
      %p117 = scmp.lt.s32.totalorder %s14, 3
      %p118 = pnand %p116, %p117
      %p119 = pneg %p118
      // Predicated region
      $region9: #{tpu_custom_call.1} parent=5 // pred_check
        _
      $region10: #{tpu_custom_call.1} parent=5 // pred_check_branch
        %121 = sbr.rel (%p118) target = $region12
      $region11: #{tpu_custom_call.1} parent=5 // pred_region
        %s122 = ssub.s32 %s14, 1
        // Predicated region
        $region13: #{tpu_custom_call.1} parent=11 // pred_check
          %p123 = pneg %p80
        $region14: #{tpu_custom_call.1} parent=11 // pred_check_branch
          %125 = sbr.rel (%p123) target = $region16
        $region15: #{tpu_custom_call.1} parent=11 // pred_region
          %s126 = smul.u32 4, %s24
          %p127 = scmp.lt.s32.totalorder %s126, 3
          %s128 = scalar_select %p127, %s126, 3
          %s129 = scalar_lea.vmem %s1, %s128
          %s130 = smul.u32 4, %s24
        $region16: #{tpu_custom_call.1} parent=11 // pred_fallthru
          _
      $region12: #{tpu_custom_call.1} parent=5 // pred_fallthru
        _
      %p131 = scmp.lt.s32.totalorder %s14, 2
      // Predicated region
      $region17: #{tpu_custom_call.1} parent=5 // pred_check
        %p132 = pneg %p131
      $region18: #{tpu_custom_call.1} parent=5 // pred_check_branch
        %134 = sbr.rel (%p132) target = $region20
      $region19: #{tpu_custom_call.1} parent=5 // pred_region
        // Predicated region
        $region21: #{tpu_custom_call.1} parent=19 // pred_check
          %p135 = pneg %p48
        $region22: #{tpu_custom_call.1} parent=19 // pred_check_branch
          %137 = sbr.rel (%p135) target = $region24
        $region23: #{tpu_custom_call.1} parent=19 // pred_region
          %s138 = sand.u32 %s38, 1
          %s139 = scalar_lea.sflag [#allocation3], %s138
          %s140 = sand.u32 %s38, 1
          %s141 = smul.addr %s140, 64
          %s142 = scalar_lea.vmem [#allocation2], %s141
          %s143 = smul.u32 4, %s22
          %145 = vsyncadd %s139, 0
          %s146 = smul.addr %s143, 2
          %s147 = smul.addr %s21, 8
          %s148 = sadd.s32 %s146, %s147
          %s149 = smul.addr %s148, 8
          %s150 = scalar_lea.hbm %s0, %s149
          %s151 = sshll.u32 %s150, 4
          %s152 = int_to_ptr.hbm [resolvable:$true] %s151
          %s153 = sshll.u32 %s142, 4
          %s154 = int_to_ptr.vmem [resolvable:$true] %s153
          %159 = dma.hbm_to_vmem [thread:$0]  %s152, 1024, %s154, %s139, 128, 128, 8
        $region24: #{tpu_custom_call.1} parent=19 // pred_fallthru
          _
      $region20: #{tpu_custom_call.1} parent=5 // pred_fallthru
        _
      %p160 = scmp.le.s32.totalorder 1, %s14
      %p161 = scmp.lt.s32.totalorder %s14, 3
      %p162 = pnand %p160, %p161
      %p163 = pneg %p162
      // Predicated region
      $region25: #{tpu_custom_call.1} parent=5 // pred_check
        _
      $region26: #{tpu_custom_call.1} parent=5 // pred_check_branch
        %165 = sbr.rel (%p162) target = $region28
      $region27: #{tpu_custom_call.1} parent=5 // pred_region
        %s166 = ssub.s32 %s14, 1
        %s167 = sand.u32 %s41, 1
        %s168 = scalar_lea.sflag [#allocation3], %s167
        %s169 = sand.u32 %s41, 1
        %s170 = smul.addr %s169, 64
        %s171 = scalar_lea.vmem [#allocation2], %s170
        // Predicated region
        $region29: #{tpu_custom_call.1} parent=27 // pred_check
          %p172 = pneg %p54
        $region30: #{tpu_custom_call.1} parent=27 // pred_check_branch
          %174 = sbr.rel (%p172) target = $region32
        $region31: #{tpu_custom_call.1} parent=27 // pred_region
          %176 = dma.done %s168, 1024
        $region32: #{tpu_custom_call.1} parent=27 // pred_fallthru
          _
        %s177 = sand.u32 %s41, 1
        %s178 = scalar_lea.sflag [#allocation3], %s177
        %s179 = sand.u32 %s41, 1
        %s180 = smul.addr %s179, 64
        %s181 = scalar_lea.vmem [#allocation2], %s180
        %p182 = pneg %p54
        %p183 = pneg %p51
        %s184 = smul.u32 4, %s24
        %p185 = scmp.lt.s32.totalorder %s184, 3
        %s186 = scalar_select %p185, %s184, 3
        %s187 = scalar_lea.vmem %s1, %s186
        %p188 = pneg %p80
        %p189 = pneg %p77
        %p190 = pneg %p108
        %p191 = pneg %p105
        %s192 = sand.u32 %s95, 1
        %s193 = scalar_lea.sflag [#allocation4], %s192
        %s194 = sand.u32 %s95, 1
        %s195 = smul.addr %s194, 64
        %s196 = scalar_lea.vmem [#allocation5], %s195
        %s197 = smul.u32 4, %s24
        %s198 = smul.u32 4, %s24
        %p199 = scmp.lt.s32.totalorder %s198, 3
        %s200 = scalar_select %p199, %s198, 3
        %s201 = scalar_lea.vmem %s1, %s200
        %s202 = smul.u32 4, %s24
        %s203 = smul.u32 4, %s24
        %v204 = vld [vmem:[%s171] sm:$0xff]
        %v205 = vld [vmem:[%s171 + $0x8] sm:$0xff]
        %v206 = vld [vmem:[%s171 + $0x10] sm:$0xff]
        %v207 = vld [vmem:[%s171 + $0x18] sm:$0xff]
        %v208 = vld [vmem:[%s171 + $0x20] sm:$0xff]
        %v209 = vld [vmem:[%s171 + $0x28] sm:$0xff]
        %v210 = vld [vmem:[%s171 + $0x30] sm:$0xff]
        %v211 = vld [vmem:[%s171 + $0x38] sm:$0xff]
        %vm212 = vcmask 130048
        %v213 = vsel %vm212, %v204, 0.0
        %v214 = vsel %vm212, %v205, 0.0
        %v215 = vadd.f32 %v213, %v214
        %v216 = vrot.slane %v215, 4
        %v217 = vadd.f32 %v215, %v216
        %v218 = vrot.slane %v217, 2
        %v219 = vadd.f32 %v217, %v218
        %v220 = vrot.slane %v219, 1
        %v221 = vadd.f32 %v219, %v220
        %v222 = vsel %vm212, %v206, 0.0
        %v223 = vsel %vm212, %v207, 0.0
        %v224 = vadd.f32 %v222, %v223
        %v225 = vrot.slane %v224, 4
        %v226 = vadd.f32 %v224, %v225
        %v227 = vrot.slane %v226, 2
        %v228 = vadd.f32 %v226, %v227
        %v229 = vrot.slane %v228, 1
        %v230 = vadd.f32 %v228, %v229
        %v231 = vsel %vm212, %v208, 0.0
        %v232 = vsel %vm212, %v209, 0.0
        %v233 = vadd.f32 %v231, %v232
        %v234 = vrot.slane %v233, 4
        %v235 = vadd.f32 %v233, %v234
        %v236 = vrot.slane %v235, 2
        %v237 = vadd.f32 %v235, %v236
        %v238 = vrot.slane %v237, 1
        %v239 = vadd.f32 %v237, %v238
        %v240 = vsel %vm212, %v210, 0.0
        %v241 = vsel %vm212, %v211, 0.0
        %v242 = vadd.f32 %v240, %v241
        %v243 = vrot.slane %v242, 4
        %v244 = vadd.f32 %v242, %v243
        %v245 = vrot.slane %v244, 2
        %v246 = vadd.f32 %v244, %v245
        %v247 = vrot.slane %v246, 1
        %v248 = vadd.f32 %v246, %v247
        %v249 = vadd.f32 %v221, 0.0
        %v250 = vadd.f32 %v230, 0.0
        %v251 = vadd.f32 %v239, 0.0
        %v252 = vadd.f32 %v248, 0.0
        %v253 = vld [vmem:[%s201] sm:$0x1]
        %v254 = vld [vmem:[%s201 + $0x1] sm:$0x1]
        %v255 = vld [vmem:[%s201 + $0x2] sm:$0x1]
        %v256 = vld [vmem:[%s201 + $0x3] sm:$0x1]
        %s257 = scalar_lea.vmem %s201, 4
        %v258 = vld [vmem:[%s257] sm:$0x1]
        %v259 = vld [vmem:[%s257 + $0x1] sm:$0x1]
        %v260 = vld [vmem:[%s257 + $0x2] sm:$0x1]
        %v261 = vld [vmem:[%s257 + $0x3] sm:$0x1]
        %263 = vset.pattern.permute.xlu0 0
        %264 = vperm.xlu0 %263, %v258
        %v265 = vpop.permute.xlu0 %264
        %v267 = vperm.slane %v265, 0
        %269 = vset.pattern.permute.xlu0 0
        %270 = vperm.xlu0 %269, %v259
        %v271 = vpop.permute.xlu0 %270
        %v273 = vperm.slane %v271, 0
        %275 = vset.pattern.permute.xlu0 0
        %276 = vperm.xlu0 %275, %v260
        %v277 = vpop.permute.xlu0 %276
        %v279 = vperm.slane %v277, 0
        %281 = vset.pattern.permute.xlu0 0
        %282 = vperm.xlu0 %281, %v261
        %v283 = vpop.permute.xlu0 %282
        %v285 = vperm.slane %v283, 0
        %v286 = vmul.f32 %v267, %v249
        %v287 = vmul.f32 %v273, %v250
        %v288 = vmul.f32 %v279, %v251
        %v289 = vmul.f32 %v285, %v252
        %290 = vadd.xlane.f32.xlu0 %v213
        %v291 = vpop.xlane.xlu0 %290
        %292 = vadd.xlane.f32.xlu0 %v214
        %v293 = vpop.xlane.xlu0 %292
        %294 = vadd.xlane.f32.xlu0 %v222
        %v295 = vpop.xlane.xlu0 %294
        %296 = vadd.xlane.f32.xlu0 %v223
        %v297 = vpop.xlane.xlu0 %296
        %298 = vadd.xlane.f32.xlu0 %v231
        %v299 = vpop.xlane.xlu0 %298
        %300 = vadd.xlane.f32.xlu0 %v232
        %v301 = vpop.xlane.xlu0 %300
        %302 = vadd.xlane.f32.xlu0 %v240
        %v303 = vpop.xlane.xlu0 %302
        %304 = vadd.xlane.f32.xlu0 %v241
        %v305 = vpop.xlane.xlu0 %304
        %v310 = vperm.slane %v253, 0
        %v311 = vperm.slane %v254, 0
        %v312 = vperm.slane %v255, 0
        %v313 = vperm.slane %v256, 0
        %v318 = vmul.f32 %v310, %v291
        %v319 = vmul.f32 %v310, %v293
        %v320 = vmul.f32 %v311, %v295
        %v321 = vmul.f32 %v311, %v297
        %v322 = vmul.f32 %v312, %v299
        %v323 = vmul.f32 %v312, %v301
        %v324 = vmul.f32 %v313, %v303
        %v325 = vmul.f32 %v313, %v305
        %327 = vset.pattern.permute.xlu0 0
        %328 = vperm.xlu0 %327, %v318
        %v329 = vpop.permute.xlu0 %328
        %332 = vset.pattern.permute.xlu0 0
        %333 = vperm.xlu0 %332, %v319
        %v334 = vpop.permute.xlu0 %333
        %337 = vset.pattern.permute.xlu0 0
        %338 = vperm.xlu0 %337, %v320
        %v339 = vpop.permute.xlu0 %338
        %342 = vset.pattern.permute.xlu0 0
        %343 = vperm.xlu0 %342, %v321
        %v344 = vpop.permute.xlu0 %343
        %347 = vset.pattern.permute.xlu0 0
        %348 = vperm.xlu0 %347, %v322
        %v349 = vpop.permute.xlu0 %348
        %352 = vset.pattern.permute.xlu0 0
        %353 = vperm.xlu0 %352, %v323
        %v354 = vpop.permute.xlu0 %353
        %357 = vset.pattern.permute.xlu0 0
        %358 = vperm.xlu0 %357, %v324
        %v359 = vpop.permute.xlu0 %358
        %362 = vset.pattern.permute.xlu0 0
        %363 = vperm.xlu0 %362, %v325
        %v364 = vpop.permute.xlu0 %363
        %v366 = vadd.f32 %v204, %v329
        %v367 = vadd.f32 %v205, %v334
        %v368 = vadd.f32 %v206, %v339
        %v369 = vadd.f32 %v207, %v344
        %v370 = vadd.f32 %v208, %v349
        %v371 = vadd.f32 %v209, %v354
        %v372 = vadd.f32 %v210, %v359
        %v373 = vadd.f32 %v211, %v364
        %v374 = vadd.f32 %v366, %v286
        %v375 = vadd.f32 %v367, %v286
        %v376 = vadd.f32 %v368, %v287
        %v377 = vadd.f32 %v369, %v287
        %v378 = vadd.f32 %v370, %v288
        %v379 = vadd.f32 %v371, %v288
        %v380 = vadd.f32 %v372, %v289
        %v381 = vadd.f32 %v373, %v289
        %382 = vst.msk [vmem:[%s196] sm:$0xff] %vm212, %v374
        %383 = vst.msk [vmem:[%s196 + $0x8] sm:$0xff] %vm212, %v375
        %384 = vst.msk [vmem:[%s196 + $0x10] sm:$0xff] %vm212, %v376
        %385 = vst.msk [vmem:[%s196 + $0x18] sm:$0xff] %vm212, %v377
        %386 = vst.msk [vmem:[%s196 + $0x20] sm:$0xff] %vm212, %v378
        %387 = vst.msk [vmem:[%s196 + $0x28] sm:$0xff] %vm212, %v379
        %388 = vst.msk [vmem:[%s196 + $0x30] sm:$0xff] %vm212, %v380
        %389 = vst.msk [vmem:[%s196 + $0x38] sm:$0xff] %vm212, %v381
        %s390 = sand.u32 %s95, 1
        %s391 = scalar_lea.sflag [#allocation4], %s390
        %s392 = sand.u32 %s95, 1
        %s393 = smul.addr %s392, 64
        %s394 = scalar_lea.vmem [#allocation5], %s393
        // Predicated region
        $region33: #{tpu_custom_call.1} parent=27 // pred_check
          %p395 = pneg %p105
        $region34: #{tpu_custom_call.1} parent=27 // pred_check_branch
          %397 = sbr.rel (%p395) target = $region36
        $region35: #{tpu_custom_call.1} parent=27 // pred_region
          %s398 = smul.u32 4, %s24
          %400 = vsyncadd %s391, 0
          %s401 = smul.addr %s398, 2
          %s402 = smul.addr %s23, 8
          %s403 = sadd.s32 %s401, %s402
          %s404 = smul.addr %s403, 8
          %s405 = scalar_lea.hbm %s2, %s404
          %s406 = sshll.u32 %s394, 4
          %s407 = int_to_ptr.vmem [resolvable:$true] %s406
          %s408 = sshll.u32 %s405, 4
          %s409 = int_to_ptr.hbm [resolvable:$true] %s408
          %414 = dma.vmem_to_hbm [thread:$0]  %s407, 1024, %s409, %s391, 128, 128, 8
        $region36: #{tpu_custom_call.1} parent=27 // pred_fallthru
          _
      $region28: #{tpu_custom_call.1} parent=5 // pred_fallthru
        _
      %p415 = scmp.le.s32.totalorder 2, %s14
      // Predicated region
      $region37: #{tpu_custom_call.1} parent=5 // pred_check
        %p416 = pneg %p415
      $region38: #{tpu_custom_call.1} parent=5 // pred_check_branch
        %418 = sbr.rel (%p416) target = $region40
      $region39: #{tpu_custom_call.1} parent=5 // pred_region
        %s419 = ssub.s32 %s14, 2
        // Predicated region
        $region41: #{tpu_custom_call.1} parent=39 // pred_check
          %p420 = pneg %p111
        $region42: #{tpu_custom_call.1} parent=39 // pred_check_branch
          %422 = sbr.rel (%p420) target = $region44
        $region43: #{tpu_custom_call.1} parent=39 // pred_region
          %s423 = sand.u32 %s96, 1
          %s424 = scalar_lea.sflag [#allocation4], %s423
          %s425 = sand.u32 %s96, 1
          %s426 = smul.addr %s425, 64
          %s427 = scalar_lea.vmem [#allocation5], %s426
          %429 = dma.done %s424, 1024
        $region44: #{tpu_custom_call.1} parent=39 // pred_fallthru
          _
      $region40: #{tpu_custom_call.1} parent=5 // pred_fallthru
        _
    $region6: #{tpu_custom_call.1} parent=1 // loop_footer
      %s18 = sadd.s32 1, %s14
    $region7: #{tpu_custom_call.1} parent=1 // loop_footer_branch
      %13 = sbr.rel target = $region3
    $region8: #{tpu_custom_call.1} parent=1 // loop_exit
      _
    %430 = vsyncpa [#allocation3], 1
    %s431 = scalar_lea.sflag [#allocation3], 1
    %432 = vsyncpa %s431, 1
    %433 = vsyncpa [#allocation4], 1
    %s434 = scalar_lea.sflag [#allocation4], 1
    %435 = vsyncpa %s434, 1

</llo_original>
